<compile_context>
chip_gen: v7x
topology: tpu7x:2x2x1
jax: 0.10.0
libtpu: 0.0.40
codegen_flags: <defaults>
</compile_context>

<pallas_src>
import jax
import jax.numpy as jnp
from jax import lax
from jax.experimental import pallas as pl
from jax.experimental.pallas import tpu as pltpu


def _round_up(x, m):
    return (x + m - 1) // m * m


def _gated_matmul_kernel(p_ref, w_ref, b_ref, o_ref):
    # p_ref : (TILE_M, Kc_pad)    bf16  im2col patches (rows = output pixels)
    # w_ref : (Kc_pad, 2*TILE_C)  bf16  [value | gate] weights for this c-tile
    # b_ref : (1, 2*TILE_C)       f32   [value | gate] bias for this c-tile
    # o_ref : (TILE_M, TILE_C)    bf16  gated output (lane-dense)
    tile_c = o_ref.shape[1]
    acc = jnp.dot(p_ref[...], w_ref[...], preferred_element_type=jnp.float32)
    acc = acc + b_ref[...]
    val = acc[:, :tile_c]        # static, 128-aligned lane slices -> free
    gate = acc[:, tile_c:]
    o_ref[...] = (val * jax.nn.sigmoid(gate)).astype(o_ref.dtype)


def _pick_tile_m(M, Kc_pad, tile_c, budget_bytes, max_tile=4096):
    """Largest row tile (multiple of 8, <= max_tile) whose double-buffered
    per-step working set fits within budget_bytes."""
    fixed = 2 * (Kc_pad * 2 * tile_c * 2) + 2 * (2 * tile_c * 4)   # weights + bias
    per_row = 2 * (Kc_pad * 2 + tile_c * 2)                        # patches + out
    cap = max(8, (budget_bytes - fixed) // per_row)
    tile_m = min(max_tile, cap, _round_up(M, 8))
    return max(8, (tile_m // 8) * 8)


def gated_conv2d_pallas(x_nchw, w_oihw, b, kernel_size):
    """Forward pass of GatedConv2d.

    x_nchw : (N, Cin, H, W)         float32
    w_oihw : (2*Cout, Cin, K, K)    float32  (PyTorch conv weight layout)
    b      : (2*Cout,)              float32
    returns: (N, Cout, H, W)        x_nchw.dtype
    """
    N, Cin, H, W = x_nchw.shape
    K = int(kernel_size)
    assert K % 2 == 1, "GatedConv2d assumes odd kernel_size ('same' padding, stride 1)."
    two_cout = w_oihw.shape[0]
    assert two_cout % 2 == 0 and w_oihw.shape[1] == Cin and tuple(w_oihw.shape[2:]) == (K, K)
    assert b.shape == (two_cout,)
    Cout = two_cout // 2
    p = K // 2
    out_dtype = x_nchw.dtype

    # ---------------- JAX-side glue: layout, bf16 cast, im2col, padding -----
    x_nhwc = jnp.transpose(x_nchw, (0, 2, 3, 1)).astype(jnp.bfloat16)   # (N,H,W,Cin)
    x_sp = jnp.pad(x_nhwc, ((0, 0), (p, p), (p, p), (0, 0)))            # (N,Hp,Wp,Cin)

    # im2col with (kh, kw, cin) tap ordering -> contraction depth K*K*Cin.
    taps = [x_sp[:, kh:kh + H, kw:kw + W, :] for kh in range(K) for kw in range(K)]
    patches = jnp.concatenate(taps, axis=-1).reshape(N * H * W, K * K * Cin)

    M = N * H * W
    Kc = K * K * Cin
    Kc_pad = _round_up(Kc, 16)          # bf16 packing granularity only (36 -> 48)
    Cout_pad = _round_up(Cout, 128)     # lane-dense output channels
    tile_c = 256 if Cout_pad % 256 == 0 else 128
    n_ct = Cout_pad // tile_c

    tile_m = _pick_tile_m(M, Kc_pad, tile_c, budget_bytes=24 * 1024 * 1024)
    M_pad = _round_up(M, tile_m)

    patches = jnp.pad(patches, ((0, M_pad - M), (0, Kc_pad - Kc)))

    # Weights: OIHW -> (K,K,Cin,2Cout) -> (K*K*Cin, 2Cout); split value/gate,
    # pad, then interleave per output-channel tile so one (Kc_pad, 2*tile_c)
    # block per grid step holds [value_tile | gate_tile] contiguously.
    w_full = jnp.transpose(w_oihw, (2, 3, 1, 0)).reshape(Kc, two_cout)
    w_val = jnp.pad(w_full[:, :Cout], ((0, Kc_pad - Kc), (0, Cout_pad - Cout)))
    w_gate = jnp.pad(w_full[:, Cout:], ((0, Kc_pad - Kc), (0, Cout_pad - Cout)))
    w_all = jnp.concatenate(
        [w_val.reshape(Kc_pad, n_ct, tile_c), w_gate.reshape(Kc_pad, n_ct, tile_c)],
        axis=-1).reshape(Kc_pad, 2 * Cout_pad).astype(jnp.bfloat16)

    b_val = jnp.pad(b[:Cout], (0, Cout_pad - Cout)).astype(jnp.float32)
    b_gate = jnp.pad(b[Cout:], (0, Cout_pad - Cout)).astype(jnp.float32)
    b_all = jnp.concatenate(
        [b_val.reshape(1, n_ct, tile_c), b_gate.reshape(1, n_ct, tile_c)],
        axis=-1).reshape(1, 2 * Cout_pad)

    grid = (M_pad // tile_m, n_ct)

    out = pl.pallas_call(
        _gated_matmul_kernel,
        out_shape=jax.ShapeDtypeStruct((M_pad, Cout_pad), jnp.bfloat16),
        grid_spec=pltpu.PrefetchScalarGridSpec(
            num_scalar_prefetch=0,
            grid=grid,
            in_specs=[
                # patches: constant across the channel axis -> fetched once per
                # row tile by the auto-pipeliner.
                pl.BlockSpec((tile_m, Kc_pad), lambda m, c: (m, 0)),
                # merged [value|gate] weights + biases: constant along the row axis.
                pl.BlockSpec((Kc_pad, 2 * tile_c), lambda m, c: (0, c)),
                pl.BlockSpec((1, 2 * tile_c), lambda m, c: (0, c)),
            ],
            out_specs=pl.BlockSpec((tile_m, tile_c), lambda m, c: (m, c)),
        ),
        compiler_params=pltpu.CompilerParams(
            # Row axis parallel -> balanced megacore split on v7x even when the
            # channel axis has a single tile.
            dimension_semantics=("parallel", "arbitrary"),
            vmem_limit_bytes=32 * 1024 * 1024,
        ),
    )(patches, w_all, b_all)

    # Drop padding, restore NCHW and caller dtype.
    out = out[:M, :Cout].reshape(N, H, W, Cout).astype(out_dtype)
    return jnp.transpose(out, (0, 3, 1, 2))


def init_gated_conv_params(key, in_channels, out_channels, kernel_size):
    """Matches the module's init_weights(): kaiming_uniform_(nonlinearity='sigmoid')
    (gain=1, fan_in mode) for the weight, zeros for the bias."""
    K = kernel_size
    fan_in = in_channels * K * K
    bound = (3.0 / fan_in) ** 0.5
    w = jax.random.uniform(
        key, (out_channels * 2, in_channels, K, K),
        minval=-bound, maxval=bound, dtype=jnp.float32)
    b = jnp.zeros((out_channels * 2,), jnp.float32)
    return w, b


def _reference(x_nchw, w_oihw, b, kernel_size, compute_dtype=jnp.float32):
    """Pure-JAX reference mirroring the PyTorch forward (for validation)."""
    p = kernel_size // 2
    out = lax.conv_general_dilated(
        x_nchw.astype(compute_dtype), w_oihw.astype(compute_dtype),
        window_strides=(1, 1),
        padding=((p, p), (p, p)),
        dimension_numbers=('NCHW', 'OIHW', 'NCHW'),
        preferred_element_type=jnp.float32)
    out = out + b[None, :, None, None]
    Cout = w_oihw.shape[0] // 2
    val, gate = out[:, :Cout], out[:, Cout:]
    return val * jax.nn.sigmoid(gate)


if __name__ == "__main__":
    key = jax.random.PRNGKey(0)
    k_x, k_w = jax.random.split(key)

    N, Cin, Cout, K, H, W = 2, 4, 4, 3, 16, 16

    x = jax.random.normal(k_x, (N, Cin, H, W), dtype=jnp.float32)
    w, b = init_gated_conv_params(k_w, Cin, Cout, K)

    out = jax.block_until_ready(gated_conv2d_pallas(x, w, b, K))
    assert out.shape == (N, Cout, H, W)

    # Check vs an independent XLA conv at matching precision (bf16 inputs,
    # f32 accumulation); tolerance covers the kernel's final bf16 store.
    ref_bf16 = _reference(x, w, b, K, compute_dtype=jnp.bfloat16)
    assert jnp.allclose(out, ref_bf16, atol=1e-2, rtol=1e-2), "mismatch vs bf16 reference"

    # Loose sanity check vs the full-f32 reference (bounds bf16 quantization error).
    ref_f32 = _reference(x, w, b, K, compute_dtype=jnp.float32)
    assert jnp.allclose(out, ref_f32, atol=1e-1, rtol=1e-1), "mismatch vs f32 reference"

    print("KERNEL_OK")
</pallas_src>

<mosaic_0001>
module attributes {stable_mosaic.version = 11 : i64} {
  func.func @_gated_matmul_kernel(%arg0: i32, %arg1: i32, %arg2: memref<512x48xbf16, #tpu.memory_space<vmem>>, %arg3: memref<48x256xbf16, #tpu.memory_space<vmem>>, %arg4: memref<1x256xf32, #tpu.memory_space<vmem>>, %arg5: memref<512x128xbf16, #tpu.memory_space<vmem>>) attributes {dimension_semantics = [#tpu.dimension_semantics<parallel>, #tpu.dimension_semantics<arbitrary>], iteration_bounds = array<i64: 1, 1>, scalar_prefetch = 0 : i64, scratch_operands = 0 : i64, tpu.core_type = #tpu.core_type<tc>, window_params = [{transform_indices = @transform_0, window_bounds = array<i64: 512, 48>}, {transform_indices = @transform_1, window_bounds = array<i64: 48, 256>}, {transform_indices = @transform_2, window_bounds = array<i64: 1, 256>}, {transform_indices = @transform_3, window_bounds = array<i64: 512, 128>}]} {
    %c0 = arith.constant 0 : index
    %c0_0 = arith.constant 0 : index
    %0 = vector.load %arg2[%c0, %c0_0] : memref<512x48xbf16, #tpu.memory_space<vmem>>, vector<512x48xbf16>
    %c0_1 = arith.constant 0 : index
    %c0_2 = arith.constant 0 : index
    %1 = vector.load %arg3[%c0_1, %c0_2] : memref<48x256xbf16, #tpu.memory_space<vmem>>, vector<48x256xbf16>
    %cst = arith.constant dense<0.000000e+00> : vector<512x256xf32>
    %2 = tpu.matmul %0, %1, %cst {dimension_numbers = #tpu.dot_dimension_numbers<[1], [0], [0], [1], [0, 0, 1, 1], [], []>} : vector<512x48xbf16>, vector<48x256xbf16>, vector<512x256xf32> -> vector<512x256xf32>
    %c0_3 = arith.constant 0 : index
    %c0_4 = arith.constant 0 : index
    %3 = vector.load %arg4[%c0_3, %c0_4] : memref<1x256xf32, #tpu.memory_space<vmem>>, vector<1x256xf32>
    %4 = vector.broadcast %3 : vector<1x256xf32> to vector<512x256xf32>
    %5 = arith.addf %2, %4 : vector<512x256xf32>
    %6 = vector.extract_strided_slice %5 {offsets = [0, 0], sizes = [512, 128], strides = [1, 1]} : vector<512x256xf32> to vector<512x128xf32>
    %7 = vector.extract_strided_slice %5 {offsets = [0, 128], sizes = [512, 128], strides = [1, 1]} : vector<512x256xf32> to vector<512x128xf32>
    %8 = arith.negf %7 : vector<512x128xf32>
    %9 = math.exp %8 : vector<512x128xf32>
    %cst_5 = arith.constant 1.000000e+00 : f32
    %10 = vector.broadcast %cst_5 : f32 to vector<512x128xf32>
    %11 = arith.addf %10, %9 : vector<512x128xf32>
    %12 = arith.divf %10, %11 : vector<512x128xf32>
    %13 = arith.mulf %6, %12 : vector<512x128xf32>
    %14 = arith.truncf %13 : vector<512x128xf32> to vector<512x128xbf16>
    %c0_6 = arith.constant 0 : index
    %c0_7 = arith.constant 0 : index
    %15 = vector.load %arg5[%c0_6, %c0_7] : memref<512x128xbf16, #tpu.memory_space<vmem>>, vector<512x128xbf16>
    tpu.vector_store %arg5[%c0_6, %c0_7], %14 {strides = array<i32>} : memref<512x128xbf16, #tpu.memory_space<vmem>>, vector<512x128xbf16>,
    return
  }
  func.func @transform_0(%arg0: i32, %arg1: i32) -> (i32, i32) {
    %c0_i32 = arith.constant 0 : i32
    %c0_i32_0 = arith.constant 0 : i32
    return %arg0, %c0_i32 : i32, i32
  }
  func.func @transform_1(%arg0: i32, %arg1: i32) -> (i32, i32) {
    %c0_i32 = arith.constant 0 : i32
    %c0_i32_0 = arith.constant 0 : i32
    return %c0_i32, %arg1 : i32, i32
  }
  func.func @transform_2(%arg0: i32, %arg1: i32) -> (i32, i32) {
    %c0_i32 = arith.constant 0 : i32
    %c0_i32_0 = arith.constant 0 : i32
    return %c0_i32, %arg1 : i32, i32
  }
  func.func @transform_3(%arg0: i32, %arg1: i32) -> (i32, i32) {
    %c0_i32 = arith.constant 0 : i32
    return %arg0, %arg1 : i32, i32
  }
}

</mosaic_0001>

<llo_original>
// kernel: tpu_custom_call.1
$region0: #{tpu_custom_call.1}
  #allocation0 [shape = 'u32[]', space=smem, size = 0x4, offset = 0x4, fixed_abs, tag = 'smem constant byte address 0x4 - core index']
  #allocation1 [shape = 'u32[144,128]{1,0:T(1,128)}', space=vmem, size = 0x12000, scoped, tag = 'internal scratch']
  %s0 = inlined_call_operand.vmem [shape: bf16[512,48], index: 0, kind: input, shape index: {}]
  %s1 = inlined_call_operand.vmem [shape: bf16[48,256], index: 1, kind: input, shape index: {}]
  %s2 = inlined_call_operand.vmem [shape: f32[1,256], index: 2, kind: input, shape index: {}]
  %s3 = inlined_call_operand.hbm [shape: bf16[512,128], index: 3, kind: output, shape index: {}]
  %s4 = sld [smem:[#allocation0]]
  $region22: #{tpu_custom_call.1} parent=0
    _
  %s6 = ssub.s32 1, %s4
  %s7 = scalar_select 0, %s6, %s4
  $region1: #{tpu_custom_call.1} parent=0
    #allocation2 [shape = 'u8[131072]{0}', space=vmem, size = 0x20000, scoped, tag = 'output window, operand 0, single buffered']
    #allocation3 [shape = 's32[1]{0}', space=sflag, size = 0x4, scoped, tag = 'scoped memory for tpu_custom_call.1']
    %8 = vsyncpa [#allocation3], 0
    // Predicated region
    $region2: #{tpu_custom_call.1} parent=1 // pred_check
      _
    $region3: #{tpu_custom_call.1} parent=1 // pred_check_branch
      %10 = sbr.rel (0) target = $region5
    $region4: #{tpu_custom_call.1} parent=1 // pred_region
      _
    $region5: #{tpu_custom_call.1} parent=1 // pred_fallthru
      _
    // Predicated region
    $region6: #{tpu_custom_call.1} parent=1 // pred_check
      _
    $region7: #{tpu_custom_call.1} parent=1 // pred_check_branch
      %12 = sbr.rel (0) target = $region9
    $region8: #{tpu_custom_call.1} parent=1 // pred_region
      _
    $region9: #{tpu_custom_call.1} parent=1 // pred_fallthru
      _
    // Predicated region
    $region10: #{tpu_custom_call.1} parent=1 // pred_check
      _
    $region11: #{tpu_custom_call.1} parent=1 // pred_check_branch
      %14 = sbr.rel (0) target = $region13
    $region12: #{tpu_custom_call.1} parent=1 // pred_region
      _
    $region13: #{tpu_custom_call.1} parent=1 // pred_fallthru
      _
    %v16 = vld [vmem:[%s0] sm:$0xf]
    %v17 = vld [vmem:[%s0 + $0x4] sm:$0xf]
    %v18 = vld [vmem:[%s0 + $0x8] sm:$0xf]
    %v19 = vld [vmem:[%s0 + $0xc] sm:$0xf]
    %v20 = vld [vmem:[%s0 + $0x10] sm:$0xf]
    %v21 = vld [vmem:[%s0 + $0x14] sm:$0xf]
    %v22 = vld [vmem:[%s0 + $0x18] sm:$0xf]
    %v23 = vld [vmem:[%s0 + $0x1c] sm:$0xf]
    %v24 = vld [vmem:[%s0 + $0x20] sm:$0xf]
    %v25 = vld [vmem:[%s0 + $0x24] sm:$0xf]
    %v26 = vld [vmem:[%s0 + $0x28] sm:$0xf]
    %v27 = vld [vmem:[%s0 + $0x2c] sm:$0xf]
    %v28 = vld [vmem:[%s0 + $0x30] sm:$0xf]
    %v29 = vld [vmem:[%s0 + $0x34] sm:$0xf]
    %v30 = vld [vmem:[%s0 + $0x38] sm:$0xf]
    %v31 = vld [vmem:[%s0 + $0x3c] sm:$0xf]
    %v32 = vld [vmem:[%s0 + $0x40] sm:$0xf]
    %v33 = vld [vmem:[%s0 + $0x44] sm:$0xf]
    %v34 = vld [vmem:[%s0 + $0x48] sm:$0xf]
    %v35 = vld [vmem:[%s0 + $0x4c] sm:$0xf]
    %v36 = vld [vmem:[%s0 + $0x50] sm:$0xf]
    %v37 = vld [vmem:[%s0 + $0x54] sm:$0xf]
    %v38 = vld [vmem:[%s0 + $0x58] sm:$0xf]
    %v39 = vld [vmem:[%s0 + $0x5c] sm:$0xf]
    %v40 = vld [vmem:[%s0 + $0x60] sm:$0xf]
    %v41 = vld [vmem:[%s0 + $0x64] sm:$0xf]
    %v42 = vld [vmem:[%s0 + $0x68] sm:$0xf]
    %v43 = vld [vmem:[%s0 + $0x6c] sm:$0xf]
    %v44 = vld [vmem:[%s0 + $0x70] sm:$0xf]
    %v45 = vld [vmem:[%s0 + $0x74] sm:$0xf]
    %v46 = vld [vmem:[%s0 + $0x78] sm:$0xf]
    %v47 = vld [vmem:[%s0 + $0x7c] sm:$0xf]
    %v48 = vld [vmem:[%s0 + $0x80] sm:$0xf]
    %v49 = vld [vmem:[%s0 + $0x84] sm:$0xf]
    %v50 = vld [vmem:[%s0 + $0x88] sm:$0xf]
    %v51 = vld [vmem:[%s0 + $0x8c] sm:$0xf]
    %v52 = vld [vmem:[%s0 + $0x90] sm:$0xf]
    %v53 = vld [vmem:[%s0 + $0x94] sm:$0xf]
    %v54 = vld [vmem:[%s0 + $0x98] sm:$0xf]
    %v55 = vld [vmem:[%s0 + $0x9c] sm:$0xf]
    %v56 = vld [vmem:[%s0 + $0xa0] sm:$0xf]
    %v57 = vld [vmem:[%s0 + $0xa4] sm:$0xf]
    %v58 = vld [vmem:[%s0 + $0xa8] sm:$0xf]
    %v59 = vld [vmem:[%s0 + $0xac] sm:$0xf]
    %v60 = vld [vmem:[%s0 + $0xb0] sm:$0xf]
    %v61 = vld [vmem:[%s0 + $0xb4] sm:$0xf]
    %v62 = vld [vmem:[%s0 + $0xb8] sm:$0xf]
    %v63 = vld [vmem:[%s0 + $0xbc] sm:$0xf]
    %v64 = vld [vmem:[%s0 + $0xc0] sm:$0xf]
    %v65 = vld [vmem:[%s0 + $0xc4] sm:$0xf]
    %v66 = vld [vmem:[%s0 + $0xc8] sm:$0xf]
    %v67 = vld [vmem:[%s0 + $0xcc] sm:$0xf]
    %v68 = vld [vmem:[%s0 + $0xd0] sm:$0xf]
    %v69 = vld [vmem:[%s0 + $0xd4] sm:$0xf]
    %v70 = vld [vmem:[%s0 + $0xd8] sm:$0xf]
    %v71 = vld [vmem:[%s0 + $0xdc] sm:$0xf]
    %v72 = vld [vmem:[%s0 + $0xe0] sm:$0xf]
    %v73 = vld [vmem:[%s0 + $0xe4] sm:$0xf]
    %v74 = vld [vmem:[%s0 + $0xe8] sm:$0xf]
    %v75 = vld [vmem:[%s0 + $0xec] sm:$0xf]
    %v76 = vld [vmem:[%s0 + $0xf0] sm:$0xf]
    %v77 = vld [vmem:[%s0 + $0xf4] sm:$0xf]
    %v78 = vld [vmem:[%s0 + $0xf8] sm:$0xf]
    %v79 = vld [vmem:[%s0 + $0xfc] sm:$0xf]
    %v80 = vld [vmem:[%s1] sm:$0xff]
    %v81 = vld [vmem:[%s1 + $0x8] sm:$0xff]
    %v82 = vld [vmem:[%s1 + $0x10] sm:$0xff]
    %v83 = vld [vmem:[%s1 + $0x18] sm:$0xff]
    %v84 = vld [vmem:[%s1 + $0x20] sm:$0xff]
    %v85 = vld [vmem:[%s1 + $0x28] sm:$0xff]
    %v86 = vld [vmem:[%s2] sm:$0x3]
    %v88 = vlaneseq
    %v89 = vshrl.u32 %v88, 7
    %v90 = vsub.s32 0, %v89
    %v91 = vrot.slane %v86, %v90
    %v92 = vlaneseq
    %v93 = vshrl.u32 %v92, 7
    %v94 = vsub.s32 1, %v93
    %v95 = vrot.slane %v86, %v94
    %v162 = vunpack.c.l.b16 %v16
    %v163 = vunpack.c.l.b16 %v17
    %v164 = vunpack.c.l.b16 %v18
    %v165 = vunpack.c.l.b16 %v19
    %v166 = vunpack.c.l.b16 %v20
    %v167 = vunpack.c.l.b16 %v21
    %v168 = vunpack.c.l.b16 %v22
    %v169 = vunpack.c.l.b16 %v23
    %v170 = vunpack.c.l.b16 %v24
    %v171 = vunpack.c.l.b16 %v25
    %v172 = vunpack.c.l.b16 %v26
    %v173 = vunpack.c.l.b16 %v27
    %v174 = vunpack.c.l.b16 %v28
    %v175 = vunpack.c.l.b16 %v29
    %v176 = vunpack.c.l.b16 %v30
    %v177 = vunpack.c.l.b16 %v31
    %v178 = vunpack.c.l.b16 %v32
    %v179 = vunpack.c.l.b16 %v33
    %v180 = vunpack.c.l.b16 %v34
    %v181 = vunpack.c.l.b16 %v35
    %v182 = vunpack.c.l.b16 %v36
    %v183 = vunpack.c.l.b16 %v37
    %v184 = vunpack.c.l.b16 %v38
    %v185 = vunpack.c.l.b16 %v39
    %v186 = vunpack.c.l.b16 %v40
    %v187 = vunpack.c.l.b16 %v41
    %v188 = vunpack.c.l.b16 %v42
    %v189 = vunpack.c.l.b16 %v43
    %v190 = vunpack.c.l.b16 %v44
    %v191 = vunpack.c.l.b16 %v45
    %v192 = vunpack.c.l.b16 %v46
    %v193 = vunpack.c.l.b16 %v47
    %v194 = vunpack.c.l.b16 %v48
    %v195 = vunpack.c.l.b16 %v49
    %v196 = vunpack.c.l.b16 %v50
    %v197 = vunpack.c.l.b16 %v51
    %v198 = vunpack.c.l.b16 %v52
    %v199 = vunpack.c.l.b16 %v53
    %v200 = vunpack.c.l.b16 %v54
    %v201 = vunpack.c.l.b16 %v55
    %v202 = vunpack.c.l.b16 %v56
    %v203 = vunpack.c.l.b16 %v57
    %v204 = vunpack.c.l.b16 %v58
    %v205 = vunpack.c.l.b16 %v59
    %v206 = vunpack.c.l.b16 %v60
    %v207 = vunpack.c.l.b16 %v61
    %v208 = vunpack.c.l.b16 %v62
    %v209 = vunpack.c.l.b16 %v63
    %v210 = vunpack.c.l.b16 %v64
    %v211 = vunpack.c.l.b16 %v65
    %v212 = vunpack.c.l.b16 %v66
    %v213 = vunpack.c.l.b16 %v67
    %v214 = vunpack.c.l.b16 %v68
    %v215 = vunpack.c.l.b16 %v69
    %v216 = vunpack.c.l.b16 %v70
    %v217 = vunpack.c.l.b16 %v71
    %v218 = vunpack.c.l.b16 %v72
    %v219 = vunpack.c.l.b16 %v73
    %v220 = vunpack.c.l.b16 %v74
    %v221 = vunpack.c.l.b16 %v75
    %v222 = vunpack.c.l.b16 %v76
    %v223 = vunpack.c.l.b16 %v77
    %v224 = vunpack.c.l.b16 %v78
    %v225 = vunpack.c.l.b16 %v79
    %v226 = vpack.c.b16 %v163, %v162
    %v227 = vpack.c.b16 %v165, %v164
    %v228 = vpack.c.b16 %v167, %v166
    %v229 = vpack.c.b16 %v169, %v168
    %v230 = vpack.c.b16 %v171, %v170
    %v231 = vpack.c.b16 %v173, %v172
    %v232 = vpack.c.b16 %v175, %v174
    %v233 = vpack.c.b16 %v177, %v176
    %v234 = vpack.c.b16 %v179, %v178
    %v235 = vpack.c.b16 %v181, %v180
    %v236 = vpack.c.b16 %v183, %v182
    %v237 = vpack.c.b16 %v185, %v184
    %v238 = vpack.c.b16 %v187, %v186
    %v239 = vpack.c.b16 %v189, %v188
    %v240 = vpack.c.b16 %v191, %v190
    %v241 = vpack.c.b16 %v193, %v192
    %v242 = vpack.c.b16 %v195, %v194
    %v243 = vpack.c.b16 %v197, %v196
    %v244 = vpack.c.b16 %v199, %v198
    %v245 = vpack.c.b16 %v201, %v200
    %v246 = vpack.c.b16 %v203, %v202
    %v247 = vpack.c.b16 %v205, %v204
    %v248 = vpack.c.b16 %v207, %v206
    %v249 = vpack.c.b16 %v209, %v208
    %v250 = vpack.c.b16 %v211, %v210
    %v251 = vpack.c.b16 %v213, %v212
    %v252 = vpack.c.b16 %v215, %v214
    %v253 = vpack.c.b16 %v217, %v216
    %v254 = vpack.c.b16 %v219, %v218
    %v255 = vpack.c.b16 %v221, %v220
    %v256 = vpack.c.b16 %v223, %v222
    %v257 = vpack.c.b16 %v225, %v224
    %v264 = vunpack.c.l.b16 %v80
    %v265 = vunpack.c.h.b16 %v80
    %v266 = vunpack.c.l.b16 %v81
    %v267 = vunpack.c.h.b16 %v81
    %v268 = vunpack.c.l.b16 %v82
    %v269 = vunpack.c.h.b16 %v82
    %v270 = vunpack.c.l.b16 %v83
    %v271 = vunpack.c.h.b16 %v83
    %v272 = vunpack.c.l.b16 %v84
    %v273 = vunpack.c.h.b16 %v84
    %v274 = vunpack.c.l.b16 %v85
    %v275 = vunpack.c.h.b16 %v85
    %v276 = vpack.c.b16 %v266, %v264
    %v277 = vpack.c.b16 %v267, %v265
    %v278 = vpack.c.b16 %v270, %v268
    %v279 = vpack.c.b16 %v271, %v269
    %v280 = vpack.c.b16 %v274, %v272
    %v281 = vpack.c.b16 %v275, %v273
    %vm288 = vcmask 392192
    %v290 = vsel %vm288, %v226, 0
    %v293 = vsel %vm288, %v227, 0
    %v296 = vsel %vm288, %v228, 0
    %v299 = vsel %vm288, %v229, 0
    %v302 = vsel %vm288, %v230, 0
    %v305 = vsel %vm288, %v231, 0
    %v308 = vsel %vm288, %v232, 0
    %v311 = vsel %vm288, %v233, 0
    %v314 = vsel %vm288, %v234, 0
    %v317 = vsel %vm288, %v235, 0
    %v320 = vsel %vm288, %v236, 0
    %v323 = vsel %vm288, %v237, 0
    %v326 = vsel %vm288, %v238, 0
    %v329 = vsel %vm288, %v239, 0
    %v332 = vsel %vm288, %v240, 0
    %v335 = vsel %vm288, %v241, 0
    %v338 = vsel %vm288, %v242, 0
    %v341 = vsel %vm288, %v243, 0
    %v344 = vsel %vm288, %v244, 0
    %v347 = vsel %vm288, %v245, 0
    %v350 = vsel %vm288, %v246, 0
    %v353 = vsel %vm288, %v247, 0
    %v356 = vsel %vm288, %v248, 0
    %v359 = vsel %vm288, %v249, 0
    %v362 = vsel %vm288, %v250, 0
    %v365 = vsel %vm288, %v251, 0
    %v368 = vsel %vm288, %v252, 0
    %v371 = vsel %vm288, %v253, 0
    %v374 = vsel %vm288, %v254, 0
    %v377 = vsel %vm288, %v255, 0
    %v380 = vsel %vm288, %v256, 0
    %v383 = vsel %vm288, %v257, 0
    %385 = vmatprep.subr.bf16.mxu0 %v277
    %386 = vmatpush1.bf16.msra.mxu0 %v276
    %387 = vmatprep.subr.bf16.mxu0 %v279
    %388 = vmatpush1.bf16.msra.mxu0 %v278
    %389 = vmatprep.subr.bf16.mxu0 %v281
    %390 = vmatpush1.bf16.msra.mxu0 %v280
    %391 = vmatprep.subr.bf16.mxu0 0
    %392 = vmatpush1.bf16.msra.mxu0 0
    %393 = vmatprep.subr.bf16.mxu0 0
    %394 = vmatpush1.bf16.msra.mxu0 0
    %395 = vmatprep.subr.bf16.mxu0 0
    %396 = vmatpush1.bf16.msra.mxu0 0
    %397 = vmatprep.subr.bf16.mxu0 0
    %398 = vmatpush1.bf16.msra.mxu0 0
    %399 = vmatprep.subr.bf16.mxu0 0
    %400 = vmatpush1.bf16.msra.mxu0 0
    %401 = vmatprep.subr.bf16.mxu0 0
    %402 = vmatpush1.bf16.msra.mxu0 0
    %403 = vmatprep.subr.bf16.mxu0 0
    %404 = vmatpush1.bf16.msra.mxu0 0
    %405 = vmatprep.subr.bf16.mxu0 0
    %406 = vmatpush1.bf16.msra.mxu0 0
    %407 = vmatprep.subr.bf16.mxu0 0
    %408 = vmatpush1.bf16.msra.mxu0 0
    %409 = vmatprep.subr.bf16.mxu0 0
    %410 = vmatpush1.bf16.msra.mxu0 0
    %411 = vmatprep.subr.bf16.mxu0 0
    %412 = vmatpush1.bf16.msra.mxu0 0
    %413 = vmatprep.subr.bf16.mxu0 0
    %414 = vmatpush1.bf16.msra.mxu0 0
    %415 = vmatprep.subr.bf16.mxu0 0
    %416 = vmatpush1.bf16.msra.mxu0 0
    %417 = vmatprep.mubr.bf16.mxu0 0
    %418 = vmatmul.mubr.bf16.gmra.mrb[0].mxu0 %v290
    %v419 = vpop.f32.mrb[0].mxu0
    %v420 = vadd.f32 %v91, %v419
    %v421 = vpop.f32.mrb[0].mxu0
    %v422 = vadd.f32 %v95, %v421
    %v423 = vpop.f32.mrb[0].mxu0
    %v424 = vadd.f32 %v91, %v423
    %v425 = vpop.f32.mrb[0].mxu0
    %v426 = vadd.f32 %v95, %v425
    %427 = vmatprep.mubr.bf16.mxu0 0
    %428 = vmatmul.mubr.bf16.gmra.mrb[0].mxu0 %v293
    %v429 = vpop.f32.mrb[0].mxu0
    %v430 = vadd.f32 %v91, %v429
    %v431 = vpop.f32.mrb[0].mxu0
    %v432 = vadd.f32 %v95, %v431
    %v433 = vpop.f32.mrb[0].mxu0
    %v434 = vadd.f32 %v91, %v433
    %v435 = vpop.f32.mrb[0].mxu0
    %v436 = vadd.f32 %v95, %v435
    %437 = vmatprep.mubr.bf16.mxu0 0
    %438 = vmatmul.mubr.bf16.gmra.mrb[0].mxu0 %v296
    %v439 = vpop.f32.mrb[0].mxu0
    %v440 = vadd.f32 %v91, %v439
    %v441 = vpop.f32.mrb[0].mxu0
    %v442 = vadd.f32 %v95, %v441
    %v443 = vpop.f32.mrb[0].mxu0
    %v444 = vadd.f32 %v91, %v443
    %v445 = vpop.f32.mrb[0].mxu0
    %v446 = vadd.f32 %v95, %v445
    %447 = vmatprep.mubr.bf16.mxu0 0
    %448 = vmatmul.mubr.bf16.gmra.mrb[0].mxu0 %v299
    %v449 = vpop.f32.mrb[0].mxu0
    %v450 = vadd.f32 %v91, %v449
    %v451 = vpop.f32.mrb[0].mxu0
    %v452 = vadd.f32 %v95, %v451
    %v453 = vpop.f32.mrb[0].mxu0
    %v454 = vadd.f32 %v91, %v453
    %v455 = vpop.f32.mrb[0].mxu0
    %v456 = vadd.f32 %v95, %v455
    %457 = vmatprep.mubr.bf16.mxu0 0
    %458 = vmatmul.mubr.bf16.gmra.mrb[0].mxu0 %v302
    %v459 = vpop.f32.mrb[0].mxu0
    %v460 = vadd.f32 %v91, %v459
    %v461 = vpop.f32.mrb[0].mxu0
    %v462 = vadd.f32 %v95, %v461
    %v463 = vpop.f32.mrb[0].mxu0
    %v464 = vadd.f32 %v91, %v463
    %v465 = vpop.f32.mrb[0].mxu0
    %v466 = vadd.f32 %v95, %v465
    %467 = vmatprep.mubr.bf16.mxu0 0
    %468 = vmatmul.mubr.bf16.gmra.mrb[0].mxu0 %v305
    %v469 = vpop.f32.mrb[0].mxu0
    %v470 = vadd.f32 %v91, %v469
    %v471 = vpop.f32.mrb[0].mxu0
    %v472 = vadd.f32 %v95, %v471
    %v473 = vpop.f32.mrb[0].mxu0
    %v474 = vadd.f32 %v91, %v473
    %v475 = vpop.f32.mrb[0].mxu0
    %v476 = vadd.f32 %v95, %v475
    %477 = vmatprep.mubr.bf16.mxu0 0
    %478 = vmatmul.mubr.bf16.gmra.mrb[0].mxu0 %v308
    %v479 = vpop.f32.mrb[0].mxu0
    %v480 = vadd.f32 %v91, %v479
    %v481 = vpop.f32.mrb[0].mxu0
    %v482 = vadd.f32 %v95, %v481
    %v483 = vpop.f32.mrb[0].mxu0
    %v484 = vadd.f32 %v91, %v483
    %v485 = vpop.f32.mrb[0].mxu0
    %v486 = vadd.f32 %v95, %v485
    %487 = vmatprep.mubr.bf16.mxu0 0
    %488 = vmatmul.mubr.bf16.gmra.mrb[0].mxu0 %v311
    %v489 = vpop.f32.mrb[0].mxu0
    %v490 = vadd.f32 %v91, %v489
    %v491 = vpop.f32.mrb[0].mxu0
    %v492 = vadd.f32 %v95, %v491
    %v493 = vpop.f32.mrb[0].mxu0
    %v494 = vadd.f32 %v91, %v493
    %v495 = vpop.f32.mrb[0].mxu0
    %v496 = vadd.f32 %v95, %v495
    %497 = vmatprep.mubr.bf16.mxu0 0
    %498 = vmatmul.mubr.bf16.gmra.mrb[0].mxu0 %v314
    %v499 = vpop.f32.mrb[0].mxu0
    %v500 = vadd.f32 %v91, %v499
    %v501 = vpop.f32.mrb[0].mxu0
    %v502 = vadd.f32 %v95, %v501
    %v503 = vpop.f32.mrb[0].mxu0
    %v504 = vadd.f32 %v91, %v503
    %v505 = vpop.f32.mrb[0].mxu0
    %v506 = vadd.f32 %v95, %v505
    %507 = vmatprep.mubr.bf16.mxu0 0
    %508 = vmatmul.mubr.bf16.gmra.mrb[0].mxu0 %v317
    %v509 = vpop.f32.mrb[0].mxu0
    %v510 = vadd.f32 %v91, %v509
    %v511 = vpop.f32.mrb[0].mxu0
    %v512 = vadd.f32 %v95, %v511
    %v513 = vpop.f32.mrb[0].mxu0
    %v514 = vadd.f32 %v91, %v513
    %v515 = vpop.f32.mrb[0].mxu0
    %v516 = vadd.f32 %v95, %v515
    %517 = vmatprep.mubr.bf16.mxu0 0
    %518 = vmatmul.mubr.bf16.gmra.mrb[0].mxu0 %v320
    %v519 = vpop.f32.mrb[0].mxu0
    %v520 = vadd.f32 %v91, %v519
    %v521 = vpop.f32.mrb[0].mxu0
    %v522 = vadd.f32 %v95, %v521
    %v523 = vpop.f32.mrb[0].mxu0
    %v524 = vadd.f32 %v91, %v523
    %v525 = vpop.f32.mrb[0].mxu0
    %v526 = vadd.f32 %v95, %v525
    %527 = vmatprep.mubr.bf16.mxu0 0
    %528 = vmatmul.mubr.bf16.gmra.mrb[0].mxu0 %v323
    %v529 = vpop.f32.mrb[0].mxu0
    %v530 = vadd.f32 %v91, %v529
    %v531 = vpop.f32.mrb[0].mxu0
    %v532 = vadd.f32 %v95, %v531
    %v533 = vpop.f32.mrb[0].mxu0
    %v534 = vadd.f32 %v91, %v533
    %v535 = vpop.f32.mrb[0].mxu0
    %v536 = vadd.f32 %v95, %v535
    %537 = vmatprep.mubr.bf16.mxu0 0
    %538 = vmatmul.mubr.bf16.gmra.mrb[0].mxu0 %v326
    %v539 = vpop.f32.mrb[0].mxu0
    %v540 = vadd.f32 %v91, %v539
    %v541 = vpop.f32.mrb[0].mxu0
    %v542 = vadd.f32 %v95, %v541
    %v543 = vpop.f32.mrb[0].mxu0
    %v544 = vadd.f32 %v91, %v543
    %v545 = vpop.f32.mrb[0].mxu0
    %v546 = vadd.f32 %v95, %v545
    %547 = vmatprep.mubr.bf16.mxu0 0
    %548 = vmatmul.mubr.bf16.gmra.mrb[0].mxu0 %v329
    %v549 = vpop.f32.mrb[0].mxu0
    %v550 = vadd.f32 %v91, %v549
    %v551 = vpop.f32.mrb[0].mxu0
    %v552 = vadd.f32 %v95, %v551
    %v553 = vpop.f32.mrb[0].mxu0
    %v554 = vadd.f32 %v91, %v553
    %v555 = vpop.f32.mrb[0].mxu0
    %v556 = vadd.f32 %v95, %v555
    %557 = vmatprep.mubr.bf16.mxu0 0
    %558 = vmatmul.mubr.bf16.gmra.mrb[0].mxu0 %v332
    %v559 = vpop.f32.mrb[0].mxu0
    %v560 = vadd.f32 %v91, %v559
    %v561 = vpop.f32.mrb[0].mxu0
    %v562 = vadd.f32 %v95, %v561
    %v563 = vpop.f32.mrb[0].mxu0
    %v564 = vadd.f32 %v91, %v563
    %v565 = vpop.f32.mrb[0].mxu0
    %v566 = vadd.f32 %v95, %v565
    %567 = vmatprep.mubr.bf16.mxu0 0
    %568 = vmatmul.mubr.bf16.gmra.mrb[0].mxu0 %v335
    %v569 = vpop.f32.mrb[0].mxu0
    %v570 = vadd.f32 %v91, %v569
    %v571 = vpop.f32.mrb[0].mxu0
    %v572 = vadd.f32 %v95, %v571
    %v573 = vpop.f32.mrb[0].mxu0
    %v574 = vadd.f32 %v91, %v573
    %v575 = vpop.f32.mrb[0].mxu0
    %v576 = vadd.f32 %v95, %v575
    %577 = vmatprep.mubr.bf16.mxu0 0
    %578 = vmatmul.mubr.bf16.gmra.mrb[0].mxu0 %v338
    %v579 = vpop.f32.mrb[0].mxu0
    %v580 = vadd.f32 %v91, %v579
    %v581 = vpop.f32.mrb[0].mxu0
    %v582 = vadd.f32 %v95, %v581
    %v583 = vpop.f32.mrb[0].mxu0
    %v584 = vadd.f32 %v91, %v583
    %v585 = vpop.f32.mrb[0].mxu0
    %v586 = vadd.f32 %v95, %v585
    %587 = vmatprep.mubr.bf16.mxu0 0
    %588 = vmatmul.mubr.bf16.gmra.mrb[0].mxu0 %v341
    %v589 = vpop.f32.mrb[0].mxu0
    %v590 = vadd.f32 %v91, %v589
    %v591 = vpop.f32.mrb[0].mxu0
    %v592 = vadd.f32 %v95, %v591
    %v593 = vpop.f32.mrb[0].mxu0
    %v594 = vadd.f32 %v91, %v593
    %v595 = vpop.f32.mrb[0].mxu0
    %v596 = vadd.f32 %v95, %v595
    %597 = vmatprep.mubr.bf16.mxu0 0
    %598 = vmatmul.mubr.bf16.gmra.mrb[0].mxu0 %v344
    %v599 = vpop.f32.mrb[0].mxu0
    %v600 = vadd.f32 %v91, %v599
    %v601 = vpop.f32.mrb[0].mxu0
    %v602 = vadd.f32 %v95, %v601
    %v603 = vpop.f32.mrb[0].mxu0
    %v604 = vadd.f32 %v91, %v603
    %v605 = vpop.f32.mrb[0].mxu0
    %v606 = vadd.f32 %v95, %v605
    %607 = vmatprep.mubr.bf16.mxu0 0
    %608 = vmatmul.mubr.bf16.gmra.mrb[0].mxu0 %v347
    %v609 = vpop.f32.mrb[0].mxu0
    %v610 = vadd.f32 %v91, %v609
    %v611 = vpop.f32.mrb[0].mxu0
    %v612 = vadd.f32 %v95, %v611
    %v613 = vpop.f32.mrb[0].mxu0
    %v614 = vadd.f32 %v91, %v613
    %v615 = vpop.f32.mrb[0].mxu0
    %v616 = vadd.f32 %v95, %v615
    %617 = vmatprep.mubr.bf16.mxu0 0
    %618 = vmatmul.mubr.bf16.gmra.mrb[0].mxu0 %v350
    %v619 = vpop.f32.mrb[0].mxu0
    %v620 = vadd.f32 %v91, %v619
    %v621 = vpop.f32.mrb[0].mxu0
    %v622 = vadd.f32 %v95, %v621
    %v623 = vpop.f32.mrb[0].mxu0
    %v624 = vadd.f32 %v91, %v623
    %v625 = vpop.f32.mrb[0].mxu0
    %v626 = vadd.f32 %v95, %v625
    %627 = vmatprep.mubr.bf16.mxu0 0
    %628 = vmatmul.mubr.bf16.gmra.mrb[0].mxu0 %v353
    %v629 = vpop.f32.mrb[0].mxu0
    %v630 = vadd.f32 %v91, %v629
    %v631 = vpop.f32.mrb[0].mxu0
    %v632 = vadd.f32 %v95, %v631
    %v633 = vpop.f32.mrb[0].mxu0
    %v634 = vadd.f32 %v91, %v633
    %v635 = vpop.f32.mrb[0].mxu0
    %v636 = vadd.f32 %v95, %v635
    %637 = vmatprep.mubr.bf16.mxu0 0
    %638 = vmatmul.mubr.bf16.gmra.mrb[0].mxu0 %v356
    %v639 = vpop.f32.mrb[0].mxu0
    %v640 = vadd.f32 %v91, %v639
    %v641 = vpop.f32.mrb[0].mxu0
    %v642 = vadd.f32 %v95, %v641
    %v643 = vpop.f32.mrb[0].mxu0
    %v644 = vadd.f32 %v91, %v643
    %v645 = vpop.f32.mrb[0].mxu0
    %v646 = vadd.f32 %v95, %v645
    %647 = vmatprep.mubr.bf16.mxu0 0
    %648 = vmatmul.mubr.bf16.gmra.mrb[0].mxu0 %v359
    %v649 = vpop.f32.mrb[0].mxu0
    %v650 = vadd.f32 %v91, %v649
    %v651 = vpop.f32.mrb[0].mxu0
    %v652 = vadd.f32 %v95, %v651
    %v653 = vpop.f32.mrb[0].mxu0
    %v654 = vadd.f32 %v91, %v653
    %v655 = vpop.f32.mrb[0].mxu0
    %v656 = vadd.f32 %v95, %v655
    %657 = vmatprep.mubr.bf16.mxu0 0
    %658 = vmatmul.mubr.bf16.gmra.mrb[0].mxu0 %v362
    %v659 = vpop.f32.mrb[0].mxu0
    %v660 = vadd.f32 %v91, %v659
    %v661 = vpop.f32.mrb[0].mxu0
    %v662 = vadd.f32 %v95, %v661
    %v663 = vpop.f32.mrb[0].mxu0
    %v664 = vadd.f32 %v91, %v663
    %v665 = vpop.f32.mrb[0].mxu0
    %v666 = vadd.f32 %v95, %v665
    %667 = vmatprep.mubr.bf16.mxu0 0
    %668 = vmatmul.mubr.bf16.gmra.mrb[0].mxu0 %v365
    %v669 = vpop.f32.mrb[0].mxu0
    %v670 = vadd.f32 %v91, %v669
    %v671 = vpop.f32.mrb[0].mxu0
    %v672 = vadd.f32 %v95, %v671
    %v673 = vpop.f32.mrb[0].mxu0
    %v674 = vadd.f32 %v91, %v673
    %v675 = vpop.f32.mrb[0].mxu0
    %v676 = vadd.f32 %v95, %v675
    %677 = vmatprep.mubr.bf16.mxu0 0
    %678 = vmatmul.mubr.bf16.gmra.mrb[0].mxu0 %v368
    %v679 = vpop.f32.mrb[0].mxu0
    %v680 = vadd.f32 %v91, %v679
    %v681 = vpop.f32.mrb[0].mxu0
    %v682 = vadd.f32 %v95, %v681
    %v683 = vpop.f32.mrb[0].mxu0
    %v684 = vadd.f32 %v91, %v683
    %v685 = vpop.f32.mrb[0].mxu0
    %v686 = vadd.f32 %v95, %v685
    %687 = vmatprep.mubr.bf16.mxu0 0
    %688 = vmatmul.mubr.bf16.gmra.mrb[0].mxu0 %v371
    %v689 = vpop.f32.mrb[0].mxu0
    %v690 = vadd.f32 %v91, %v689
    %v691 = vpop.f32.mrb[0].mxu0
    %v692 = vadd.f32 %v95, %v691
    %v693 = vpop.f32.mrb[0].mxu0
    %v694 = vadd.f32 %v91, %v693
    %v695 = vpop.f32.mrb[0].mxu0
    %v696 = vadd.f32 %v95, %v695
    %697 = vmatprep.mubr.bf16.mxu0 0
    %698 = vmatmul.mubr.bf16.gmra.mrb[0].mxu0 %v374
    %v699 = vpop.f32.mrb[0].mxu0
    %v700 = vadd.f32 %v91, %v699
    %v701 = vpop.f32.mrb[0].mxu0
    %v702 = vadd.f32 %v95, %v701
    %v703 = vpop.f32.mrb[0].mxu0
    %v704 = vadd.f32 %v91, %v703
    %v705 = vpop.f32.mrb[0].mxu0
    %v706 = vadd.f32 %v95, %v705
    %707 = vmatprep.mubr.bf16.mxu0 0
    %708 = vmatmul.mubr.bf16.gmra.mrb[0].mxu0 %v377
    %v709 = vpop.f32.mrb[0].mxu0
    %v710 = vadd.f32 %v91, %v709
    %v711 = vpop.f32.mrb[0].mxu0
    %v712 = vadd.f32 %v95, %v711
    %v713 = vpop.f32.mrb[0].mxu0
    %v714 = vadd.f32 %v91, %v713
    %v715 = vpop.f32.mrb[0].mxu0
    %v716 = vadd.f32 %v95, %v715
    %717 = vmatprep.mubr.bf16.mxu0 0
    %718 = vmatmul.mubr.bf16.gmra.mrb[0].mxu0 %v380
    %v719 = vpop.f32.mrb[0].mxu0
    %v720 = vadd.f32 %v91, %v719
    %v721 = vpop.f32.mrb[0].mxu0
    %v722 = vadd.f32 %v95, %v721
    %v723 = vpop.f32.mrb[0].mxu0
    %v724 = vadd.f32 %v91, %v723
    %v725 = vpop.f32.mrb[0].mxu0
    %v726 = vadd.f32 %v95, %v725
    %727 = vmatprep.mubr.bf16.mxu0 0
    %728 = vmatmul.mubr.bf16.gmra.mrb[0].mxu0 %v383
    %v729 = vpop.f32.mrb[0].mxu0
    %v730 = vadd.f32 %v91, %v729
    %v731 = vpop.f32.mrb[0].mxu0
    %v732 = vadd.f32 %v95, %v731
    %v733 = vpop.f32.mrb[0].mxu0
    %v734 = vadd.f32 %v91, %v733
    %v735 = vpop.f32.mrb[0].mxu0
    %v736 = vadd.f32 %v95, %v735
    %737 = vdwg.mxu0
    %v738 = vxor.u32 %v422, 2147483648
    %v739 = vxor.u32 %v426, 2147483648
    %v740 = vxor.u32 %v432, 2147483648
    %v741 = vxor.u32 %v436, 2147483648
    %v742 = vxor.u32 %v442, 2147483648
    %v743 = vxor.u32 %v446, 2147483648
    %v744 = vxor.u32 %v452, 2147483648
    %v745 = vxor.u32 %v456, 2147483648
    %v746 = vxor.u32 %v462, 2147483648
    %v747 = vxor.u32 %v466, 2147483648
    %v748 = vxor.u32 %v472, 2147483648
    %v749 = vxor.u32 %v476, 2147483648
    %v750 = vxor.u32 %v482, 2147483648
    %v751 = vxor.u32 %v486, 2147483648
    %v752 = vxor.u32 %v492, 2147483648
    %v753 = vxor.u32 %v496, 2147483648
    %v754 = vxor.u32 %v502, 2147483648
    %v755 = vxor.u32 %v506, 2147483648
    %v756 = vxor.u32 %v512, 2147483648
    %v757 = vxor.u32 %v516, 2147483648
    %v758 = vxor.u32 %v522, 2147483648
    %v759 = vxor.u32 %v526, 2147483648
    %v760 = vxor.u32 %v532, 2147483648
    %v761 = vxor.u32 %v536, 2147483648
    %v762 = vxor.u32 %v542, 2147483648
    %v763 = vxor.u32 %v546, 2147483648
    %v764 = vxor.u32 %v552, 2147483648
    %v765 = vxor.u32 %v556, 2147483648
    %v766 = vxor.u32 %v562, 2147483648
    %v767 = vxor.u32 %v566, 2147483648
    %v768 = vxor.u32 %v572, 2147483648
    %v769 = vxor.u32 %v576, 2147483648
    %v770 = vxor.u32 %v582, 2147483648
    %v771 = vxor.u32 %v586, 2147483648
    %v772 = vxor.u32 %v592, 2147483648
    %v773 = vxor.u32 %v596, 2147483648
    %v774 = vxor.u32 %v602, 2147483648
    %v775 = vxor.u32 %v606, 2147483648
    %v776 = vxor.u32 %v612, 2147483648
    %v777 = vxor.u32 %v616, 2147483648
    %v778 = vxor.u32 %v622, 2147483648
    %v779 = vxor.u32 %v626, 2147483648
    %v780 = vxor.u32 %v632, 2147483648
    %v781 = vxor.u32 %v636, 2147483648
    %v782 = vxor.u32 %v642, 2147483648
    %v783 = vxor.u32 %v646, 2147483648
    %v784 = vxor.u32 %v652, 2147483648
    %v785 = vxor.u32 %v656, 2147483648
    %v786 = vxor.u32 %v662, 2147483648
    %v787 = vxor.u32 %v666, 2147483648
    %v788 = vxor.u32 %v672, 2147483648
    %v789 = vxor.u32 %v676, 2147483648
    %v790 = vxor.u32 %v682, 2147483648
    %v791 = vxor.u32 %v686, 2147483648
    %v792 = vxor.u32 %v692, 2147483648
    %v793 = vxor.u32 %v696, 2147483648
    %v794 = vxor.u32 %v702, 2147483648
    %v795 = vxor.u32 %v706, 2147483648
    %v796 = vxor.u32 %v712, 2147483648
    %v797 = vxor.u32 %v716, 2147483648
    %v798 = vxor.u32 %v722, 2147483648
    %v799 = vxor.u32 %v726, 2147483648
    %v800 = vxor.u32 %v732, 2147483648
    %v801 = vxor.u32 %v736, 2147483648
    %v802 = vmul.f32 %v738, 1.442695
    %v803 = vpow.pop %v802
    %v804 = vmul.f32 %v739, 1.442695
    %v805 = vpow.pop %v804
    %v806 = vmul.f32 %v740, 1.442695
    %v807 = vpow.pop %v806
    %v808 = vmul.f32 %v741, 1.442695
    %v809 = vpow.pop %v808
    %v810 = vmul.f32 %v742, 1.442695
    %v811 = vpow.pop %v810
    %v812 = vmul.f32 %v743, 1.442695
    %v813 = vpow.pop %v812
    %v814 = vmul.f32 %v744, 1.442695
    %v815 = vpow.pop %v814
    %v816 = vmul.f32 %v745, 1.442695
    %v817 = vpow.pop %v816
    %v818 = vmul.f32 %v746, 1.442695
    %v819 = vpow.pop %v818
    %v820 = vmul.f32 %v747, 1.442695
    %v821 = vpow.pop %v820
    %v822 = vmul.f32 %v748, 1.442695
    %v823 = vpow.pop %v822
    %v824 = vmul.f32 %v749, 1.442695
    %v825 = vpow.pop %v824
    %v826 = vmul.f32 %v750, 1.442695
    %v827 = vpow.pop %v826
    %v828 = vmul.f32 %v751, 1.442695
    %v829 = vpow.pop %v828
    %v830 = vmul.f32 %v752, 1.442695
    %v831 = vpow.pop %v830
    %v832 = vmul.f32 %v753, 1.442695
    %v833 = vpow.pop %v832
    %v834 = vmul.f32 %v754, 1.442695
    %v835 = vpow.pop %v834
    %v836 = vmul.f32 %v755, 1.442695
    %v837 = vpow.pop %v836
    %v838 = vmul.f32 %v756, 1.442695
    %v839 = vpow.pop %v838
    %v840 = vmul.f32 %v757, 1.442695
    %v841 = vpow.pop %v840
    %v842 = vmul.f32 %v758, 1.442695
    %v843 = vpow.pop %v842
    %v844 = vmul.f32 %v759, 1.442695
    %v845 = vpow.pop %v844
    %v846 = vmul.f32 %v760, 1.442695
    %v847 = vpow.pop %v846
    %v848 = vmul.f32 %v761, 1.442695
    %v849 = vpow.pop %v848
    %v850 = vmul.f32 %v762, 1.442695
    %v851 = vpow.pop %v850
    %v852 = vmul.f32 %v763, 1.442695
    %v853 = vpow.pop %v852
    %v854 = vmul.f32 %v764, 1.442695
    %v855 = vpow.pop %v854
    %v856 = vmul.f32 %v765, 1.442695
    %v857 = vpow.pop %v856
    %v858 = vmul.f32 %v766, 1.442695
    %v859 = vpow.pop %v858
    %v860 = vmul.f32 %v767, 1.442695
    %v861 = vpow.pop %v860
    %v862 = vmul.f32 %v768, 1.442695
    %v863 = vpow.pop %v862
    %v864 = vmul.f32 %v769, 1.442695
    %v865 = vpow.pop %v864
    %v866 = vmul.f32 %v770, 1.442695
    %v867 = vpow.pop %v866
    %v868 = vmul.f32 %v771, 1.442695
    %v869 = vpow.pop %v868
    %v870 = vmul.f32 %v772, 1.442695
    %v871 = vpow.pop %v870
    %v872 = vmul.f32 %v773, 1.442695
    %v873 = vpow.pop %v872
    %v874 = vmul.f32 %v774, 1.442695
    %v875 = vpow.pop %v874
    %v876 = vmul.f32 %v775, 1.442695
    %v877 = vpow.pop %v876
    %v878 = vmul.f32 %v776, 1.442695
    %v879 = vpow.pop %v878
    %v880 = vmul.f32 %v777, 1.442695
    %v881 = vpow.pop %v880
    %v882 = vmul.f32 %v778, 1.442695
    %v883 = vpow.pop %v882
    %v884 = vmul.f32 %v779, 1.442695
    %v885 = vpow.pop %v884
    %v886 = vmul.f32 %v780, 1.442695
    %v887 = vpow.pop %v886
    %v888 = vmul.f32 %v781, 1.442695
    %v889 = vpow.pop %v888
    %v890 = vmul.f32 %v782, 1.442695
    %v891 = vpow.pop %v890
    %v892 = vmul.f32 %v783, 1.442695
    %v893 = vpow.pop %v892
    %v894 = vmul.f32 %v784, 1.442695
    %v895 = vpow.pop %v894
    %v896 = vmul.f32 %v785, 1.442695
    %v897 = vpow.pop %v896
    %v898 = vmul.f32 %v786, 1.442695
    %v899 = vpow.pop %v898
    %v900 = vmul.f32 %v787, 1.442695
    %v901 = vpow.pop %v900
    %v902 = vmul.f32 %v788, 1.442695
    %v903 = vpow.pop %v902
    %v904 = vmul.f32 %v789, 1.442695
    %v905 = vpow.pop %v904
    %v906 = vmul.f32 %v790, 1.442695
    %v907 = vpow.pop %v906
    %v908 = vmul.f32 %v791, 1.442695
    %v909 = vpow.pop %v908
    %v910 = vmul.f32 %v792, 1.442695
    %v911 = vpow.pop %v910
    %v912 = vmul.f32 %v793, 1.442695
    %v913 = vpow.pop %v912
    %v914 = vmul.f32 %v794, 1.442695
    %v915 = vpow.pop %v914
    %v916 = vmul.f32 %v795, 1.442695
    %v917 = vpow.pop %v916
    %v918 = vmul.f32 %v796, 1.442695
    %v919 = vpow.pop %v918
    %v920 = vmul.f32 %v797, 1.442695
    %v921 = vpow.pop %v920
    %v922 = vmul.f32 %v798, 1.442695
    %v923 = vpow.pop %v922
    %v924 = vmul.f32 %v799, 1.442695
    %v925 = vpow.pop %v924
    %v926 = vmul.f32 %v800, 1.442695
    %v927 = vpow.pop %v926
    %v928 = vmul.f32 %v801, 1.442695
    %v929 = vpow.pop %v928
    %v930 = vadd.f32 %v803, 1.0
    %v931 = vadd.f32 %v805, 1.0
    %v932 = vadd.f32 %v807, 1.0
    %v933 = vadd.f32 %v809, 1.0
    %v934 = vadd.f32 %v811, 1.0
    %v935 = vadd.f32 %v813, 1.0
    %v936 = vadd.f32 %v815, 1.0
    %v937 = vadd.f32 %v817, 1.0
    %v938 = vadd.f32 %v819, 1.0
    %v939 = vadd.f32 %v821, 1.0
    %v940 = vadd.f32 %v823, 1.0
    %v941 = vadd.f32 %v825, 1.0
    %v942 = vadd.f32 %v827, 1.0
    %v943 = vadd.f32 %v829, 1.0
    %v944 = vadd.f32 %v831, 1.0
    %v945 = vadd.f32 %v833, 1.0
    %v946 = vadd.f32 %v835, 1.0
    %v947 = vadd.f32 %v837, 1.0
    %v948 = vadd.f32 %v839, 1.0
    %v949 = vadd.f32 %v841, 1.0
    %v950 = vadd.f32 %v843, 1.0
    %v951 = vadd.f32 %v845, 1.0
    %v952 = vadd.f32 %v847, 1.0
    %v953 = vadd.f32 %v849, 1.0
    %v954 = vadd.f32 %v851, 1.0
    %v955 = vadd.f32 %v853, 1.0
    %v956 = vadd.f32 %v855, 1.0
    %v957 = vadd.f32 %v857, 1.0
    %v958 = vadd.f32 %v859, 1.0
    %v959 = vadd.f32 %v861, 1.0
    %v960 = vadd.f32 %v863, 1.0
    %v961 = vadd.f32 %v865, 1.0
    %v962 = vadd.f32 %v867, 1.0
    %v963 = vadd.f32 %v869, 1.0
    %v964 = vadd.f32 %v871, 1.0
    %v965 = vadd.f32 %v873, 1.0
    %v966 = vadd.f32 %v875, 1.0
    %v967 = vadd.f32 %v877, 1.0
    %v968 = vadd.f32 %v879, 1.0
    %v969 = vadd.f32 %v881, 1.0
    %v970 = vadd.f32 %v883, 1.0
    %v971 = vadd.f32 %v885, 1.0
    %v972 = vadd.f32 %v887, 1.0
    %v973 = vadd.f32 %v889, 1.0
    %v974 = vadd.f32 %v891, 1.0
    %v975 = vadd.f32 %v893, 1.0
    %v976 = vadd.f32 %v895, 1.0
    %v977 = vadd.f32 %v897, 1.0
    %v978 = vadd.f32 %v899, 1.0
    %v979 = vadd.f32 %v901, 1.0
    %v980 = vadd.f32 %v903, 1.0
    %v981 = vadd.f32 %v905, 1.0
    %v982 = vadd.f32 %v907, 1.0
    %v983 = vadd.f32 %v909, 1.0
    %v984 = vadd.f32 %v911, 1.0
    %v985 = vadd.f32 %v913, 1.0
    %v986 = vadd.f32 %v915, 1.0
    %v987 = vadd.f32 %v917, 1.0
    %v988 = vadd.f32 %v919, 1.0
    %v989 = vadd.f32 %v921, 1.0
    %v990 = vadd.f32 %v923, 1.0
    %v991 = vadd.f32 %v925, 1.0
    %v992 = vadd.f32 %v927, 1.0
    %v993 = vadd.f32 %v929, 1.0
    %v994 = vrcp.pop %v930
    %v995 = vmul.f32 1.0, %v994
    %v996 = vrcp.pop %v931
    %v997 = vmul.f32 1.0, %v996
    %v998 = vrcp.pop %v932
    %v999 = vmul.f32 1.0, %v998
    %v1000 = vrcp.pop %v933
    %v1001 = vmul.f32 1.0, %v1000
    %v1002 = vrcp.pop %v934
    %v1003 = vmul.f32 1.0, %v1002
    %v1004 = vrcp.pop %v935
    %v1005 = vmul.f32 1.0, %v1004
    %v1006 = vrcp.pop %v936
    %v1007 = vmul.f32 1.0, %v1006
    %v1008 = vrcp.pop %v937
    %v1009 = vmul.f32 1.0, %v1008
    %v1010 = vrcp.pop %v938
    %v1011 = vmul.f32 1.0, %v1010
    %v1012 = vrcp.pop %v939
    %v1013 = vmul.f32 1.0, %v1012
    %v1014 = vrcp.pop %v940
    %v1015 = vmul.f32 1.0, %v1014
    %v1016 = vrcp.pop %v941
    %v1017 = vmul.f32 1.0, %v1016
    %v1018 = vrcp.pop %v942
    %v1019 = vmul.f32 1.0, %v1018
    %v1020 = vrcp.pop %v943
    %v1021 = vmul.f32 1.0, %v1020
    %v1022 = vrcp.pop %v944
    %v1023 = vmul.f32 1.0, %v1022
    %v1024 = vrcp.pop %v945
    %v1025 = vmul.f32 1.0, %v1024
    %v1026 = vrcp.pop %v946
    %v1027 = vmul.f32 1.0, %v1026
    %v1028 = vrcp.pop %v947
    %v1029 = vmul.f32 1.0, %v1028
    %v1030 = vrcp.pop %v948
    %v1031 = vmul.f32 1.0, %v1030
    %v1032 = vrcp.pop %v949
    %v1033 = vmul.f32 1.0, %v1032
    %v1034 = vrcp.pop %v950
    %v1035 = vmul.f32 1.0, %v1034
    %v1036 = vrcp.pop %v951
    %v1037 = vmul.f32 1.0, %v1036
    %v1038 = vrcp.pop %v952
    %v1039 = vmul.f32 1.0, %v1038
    %v1040 = vrcp.pop %v953
    %v1041 = vmul.f32 1.0, %v1040
    %v1042 = vrcp.pop %v954
    %v1043 = vmul.f32 1.0, %v1042
    %v1044 = vrcp.pop %v955
    %v1045 = vmul.f32 1.0, %v1044
    %v1046 = vrcp.pop %v956
    %v1047 = vmul.f32 1.0, %v1046
    %v1048 = vrcp.pop %v957
    %v1049 = vmul.f32 1.0, %v1048
    %v1050 = vrcp.pop %v958
    %v1051 = vmul.f32 1.0, %v1050
    %v1052 = vrcp.pop %v959
    %v1053 = vmul.f32 1.0, %v1052
    %v1054 = vrcp.pop %v960
    %v1055 = vmul.f32 1.0, %v1054
    %v1056 = vrcp.pop %v961
    %v1057 = vmul.f32 1.0, %v1056
    %v1058 = vrcp.pop %v962
    %v1059 = vmul.f32 1.0, %v1058
    %v1060 = vrcp.pop %v963
    %v1061 = vmul.f32 1.0, %v1060
    %v1062 = vrcp.pop %v964
    %v1063 = vmul.f32 1.0, %v1062
    %v1064 = vrcp.pop %v965
    %v1065 = vmul.f32 1.0, %v1064
    %v1066 = vrcp.pop %v966
    %v1067 = vmul.f32 1.0, %v1066
    %v1068 = vrcp.pop %v967
    %v1069 = vmul.f32 1.0, %v1068
    %v1070 = vrcp.pop %v968
    %v1071 = vmul.f32 1.0, %v1070
    %v1072 = vrcp.pop %v969
    %v1073 = vmul.f32 1.0, %v1072
    %v1074 = vrcp.pop %v970
    %v1075 = vmul.f32 1.0, %v1074
    %v1076 = vrcp.pop %v971
    %v1077 = vmul.f32 1.0, %v1076
    %v1078 = vrcp.pop %v972
    %v1079 = vmul.f32 1.0, %v1078
    %v1080 = vrcp.pop %v973
    %v1081 = vmul.f32 1.0, %v1080
    %v1082 = vrcp.pop %v974
    %v1083 = vmul.f32 1.0, %v1082
    %v1084 = vrcp.pop %v975
    %v1085 = vmul.f32 1.0, %v1084
    %v1086 = vrcp.pop %v976
    %v1087 = vmul.f32 1.0, %v1086
    %v1088 = vrcp.pop %v977
    %v1089 = vmul.f32 1.0, %v1088
    %v1090 = vrcp.pop %v978
    %v1091 = vmul.f32 1.0, %v1090
    %v1092 = vrcp.pop %v979
    %v1093 = vmul.f32 1.0, %v1092
    %v1094 = vrcp.pop %v980
    %v1095 = vmul.f32 1.0, %v1094
    %v1096 = vrcp.pop %v981
    %v1097 = vmul.f32 1.0, %v1096
    %v1098 = vrcp.pop %v982
    %v1099 = vmul.f32 1.0, %v1098
    %v1100 = vrcp.pop %v983
    %v1101 = vmul.f32 1.0, %v1100
    %v1102 = vrcp.pop %v984
    %v1103 = vmul.f32 1.0, %v1102
    %v1104 = vrcp.pop %v985
    %v1105 = vmul.f32 1.0, %v1104
    %v1106 = vrcp.pop %v986
    %v1107 = vmul.f32 1.0, %v1106
    %v1108 = vrcp.pop %v987
    %v1109 = vmul.f32 1.0, %v1108
    %v1110 = vrcp.pop %v988
    %v1111 = vmul.f32 1.0, %v1110
    %v1112 = vrcp.pop %v989
    %v1113 = vmul.f32 1.0, %v1112
    %v1114 = vrcp.pop %v990
    %v1115 = vmul.f32 1.0, %v1114
    %v1116 = vrcp.pop %v991
    %v1117 = vmul.f32 1.0, %v1116
    %v1118 = vrcp.pop %v992
    %v1119 = vmul.f32 1.0, %v1118
    %v1120 = vrcp.pop %v993
    %v1121 = vmul.f32 1.0, %v1120
    %v1122 = vmul.f32 %v420, %v995
    %v1123 = vmul.f32 %v424, %v997
    %v1124 = vmul.f32 %v430, %v999
    %v1125 = vmul.f32 %v434, %v1001
    %v1126 = vmul.f32 %v440, %v1003
    %v1127 = vmul.f32 %v444, %v1005
    %v1128 = vmul.f32 %v450, %v1007
    %v1129 = vmul.f32 %v454, %v1009
    %v1130 = vmul.f32 %v460, %v1011
    %v1131 = vmul.f32 %v464, %v1013
    %v1132 = vmul.f32 %v470, %v1015
    %v1133 = vmul.f32 %v474, %v1017
    %v1134 = vmul.f32 %v480, %v1019
    %v1135 = vmul.f32 %v484, %v1021
    %v1136 = vmul.f32 %v490, %v1023
    %v1137 = vmul.f32 %v494, %v1025
    %v1138 = vmul.f32 %v500, %v1027
    %v1139 = vmul.f32 %v504, %v1029
    %v1140 = vmul.f32 %v510, %v1031
    %v1141 = vmul.f32 %v514, %v1033
    %v1142 = vmul.f32 %v520, %v1035
    %v1143 = vmul.f32 %v524, %v1037
    %v1144 = vmul.f32 %v530, %v1039
    %v1145 = vmul.f32 %v534, %v1041
    %v1146 = vmul.f32 %v540, %v1043
    %v1147 = vmul.f32 %v544, %v1045
    %v1148 = vmul.f32 %v550, %v1047
    %v1149 = vmul.f32 %v554, %v1049
    %v1150 = vmul.f32 %v560, %v1051
    %v1151 = vmul.f32 %v564, %v1053
    %v1152 = vmul.f32 %v570, %v1055
    %v1153 = vmul.f32 %v574, %v1057
    %v1154 = vmul.f32 %v580, %v1059
    %v1155 = vmul.f32 %v584, %v1061
    %v1156 = vmul.f32 %v590, %v1063
    %v1157 = vmul.f32 %v594, %v1065
    %v1158 = vmul.f32 %v600, %v1067
    %v1159 = vmul.f32 %v604, %v1069
    %v1160 = vmul.f32 %v610, %v1071
    %v1161 = vmul.f32 %v614, %v1073
    %v1162 = vmul.f32 %v620, %v1075
    %v1163 = vmul.f32 %v624, %v1077
    %v1164 = vmul.f32 %v630, %v1079
    %v1165 = vmul.f32 %v634, %v1081
    %v1166 = vmul.f32 %v640, %v1083
    %v1167 = vmul.f32 %v644, %v1085
    %v1168 = vmul.f32 %v650, %v1087
    %v1169 = vmul.f32 %v654, %v1089
    %v1170 = vmul.f32 %v660, %v1091
    %v1171 = vmul.f32 %v664, %v1093
    %v1172 = vmul.f32 %v670, %v1095
    %v1173 = vmul.f32 %v674, %v1097
    %v1174 = vmul.f32 %v680, %v1099
    %v1175 = vmul.f32 %v684, %v1101
    %v1176 = vmul.f32 %v690, %v1103
    %v1177 = vmul.f32 %v694, %v1105
    %v1178 = vmul.f32 %v700, %v1107
    %v1179 = vmul.f32 %v704, %v1109
    %v1180 = vmul.f32 %v710, %v1111
    %v1181 = vmul.f32 %v714, %v1113
    %v1182 = vmul.f32 %v720, %v1115
    %v1183 = vmul.f32 %v724, %v1117
    %v1184 = vmul.f32 %v730, %v1119
    %v1185 = vmul.f32 %v734, %v1121
    %v1186 = vpack.c.bf16 %v1123, %v1122
    %v1187 = vpack.c.bf16 %v1125, %v1124
    %v1188 = vpack.c.bf16 %v1127, %v1126
    %v1189 = vpack.c.bf16 %v1129, %v1128
    %v1190 = vpack.c.bf16 %v1131, %v1130
    %v1191 = vpack.c.bf16 %v1133, %v1132
    %v1192 = vpack.c.bf16 %v1135, %v1134
    %v1193 = vpack.c.bf16 %v1137, %v1136
    %v1194 = vpack.c.bf16 %v1139, %v1138
    %v1195 = vpack.c.bf16 %v1141, %v1140
    %v1196 = vpack.c.bf16 %v1143, %v1142
    %v1197 = vpack.c.bf16 %v1145, %v1144
    %v1198 = vpack.c.bf16 %v1147, %v1146
    %v1199 = vpack.c.bf16 %v1149, %v1148
    %v1200 = vpack.c.bf16 %v1151, %v1150
    %v1201 = vpack.c.bf16 %v1153, %v1152
    %v1202 = vpack.c.bf16 %v1155, %v1154
    %v1203 = vpack.c.bf16 %v1157, %v1156
    %v1204 = vpack.c.bf16 %v1159, %v1158
    %v1205 = vpack.c.bf16 %v1161, %v1160
    %v1206 = vpack.c.bf16 %v1163, %v1162
    %v1207 = vpack.c.bf16 %v1165, %v1164
    %v1208 = vpack.c.bf16 %v1167, %v1166
    %v1209 = vpack.c.bf16 %v1169, %v1168
    %v1210 = vpack.c.bf16 %v1171, %v1170
    %v1211 = vpack.c.bf16 %v1173, %v1172
    %v1212 = vpack.c.bf16 %v1175, %v1174
    %v1213 = vpack.c.bf16 %v1177, %v1176
    %v1214 = vpack.c.bf16 %v1179, %v1178
    %v1215 = vpack.c.bf16 %v1181, %v1180
    %v1216 = vpack.c.bf16 %v1183, %v1182
    %v1217 = vpack.c.bf16 %v1185, %v1184
    %v1250 = vunpack.c.l.b16 %v1186
    %v1251 = vunpack.c.h.b16 %v1186
    %v1252 = vunpack.c.l.b16 %v1187
    %v1253 = vunpack.c.h.b16 %v1187
    %v1254 = vunpack.c.l.b16 %v1188
    %v1255 = vunpack.c.h.b16 %v1188
    %v1256 = vunpack.c.l.b16 %v1189
    %v1257 = vunpack.c.h.b16 %v1189
    %v1258 = vunpack.c.l.b16 %v1190
    %v1259 = vunpack.c.h.b16 %v1190
    %v1260 = vunpack.c.l.b16 %v1191
    %v1261 = vunpack.c.h.b16 %v1191
    %v1262 = vunpack.c.l.b16 %v1192
    %v1263 = vunpack.c.h.b16 %v1192
    %v1264 = vunpack.c.l.b16 %v1193
    %v1265 = vunpack.c.h.b16 %v1193
    %v1266 = vunpack.c.l.b16 %v1194
    %v1267 = vunpack.c.h.b16 %v1194
    %v1268 = vunpack.c.l.b16 %v1195
    %v1269 = vunpack.c.h.b16 %v1195
    %v1270 = vunpack.c.l.b16 %v1196
    %v1271 = vunpack.c.h.b16 %v1196
    %v1272 = vunpack.c.l.b16 %v1197
    %v1273 = vunpack.c.h.b16 %v1197
    %v1274 = vunpack.c.l.b16 %v1198
    %v1275 = vunpack.c.h.b16 %v1198
    %v1276 = vunpack.c.l.b16 %v1199
    %v1277 = vunpack.c.h.b16 %v1199
    %v1278 = vunpack.c.l.b16 %v1200
    %v1279 = vunpack.c.h.b16 %v1200
    %v1280 = vunpack.c.l.b16 %v1201
    %v1281 = vunpack.c.h.b16 %v1201
    %v1282 = vunpack.c.l.b16 %v1202
    %v1283 = vunpack.c.h.b16 %v1202
    %v1284 = vunpack.c.l.b16 %v1203
    %v1285 = vunpack.c.h.b16 %v1203
    %v1286 = vunpack.c.l.b16 %v1204
    %v1287 = vunpack.c.h.b16 %v1204
    %v1288 = vunpack.c.l.b16 %v1205
    %v1289 = vunpack.c.h.b16 %v1205
    %v1290 = vunpack.c.l.b16 %v1206
    %v1291 = vunpack.c.h.b16 %v1206
    %v1292 = vunpack.c.l.b16 %v1207
    %v1293 = vunpack.c.h.b16 %v1207
    %v1294 = vunpack.c.l.b16 %v1208
    %v1295 = vunpack.c.h.b16 %v1208
    %v1296 = vunpack.c.l.b16 %v1209
    %v1297 = vunpack.c.h.b16 %v1209
    %v1298 = vunpack.c.l.b16 %v1210
    %v1299 = vunpack.c.h.b16 %v1210
    %v1300 = vunpack.c.l.b16 %v1211
    %v1301 = vunpack.c.h.b16 %v1211
    %v1302 = vunpack.c.l.b16 %v1212
    %v1303 = vunpack.c.h.b16 %v1212
    %v1304 = vunpack.c.l.b16 %v1213
    %v1305 = vunpack.c.h.b16 %v1213
    %v1306 = vunpack.c.l.b16 %v1214
    %v1307 = vunpack.c.h.b16 %v1214
    %v1308 = vunpack.c.l.b16 %v1215
    %v1309 = vunpack.c.h.b16 %v1215
    %v1310 = vunpack.c.l.b16 %v1216
    %v1311 = vunpack.c.h.b16 %v1216
    %v1312 = vunpack.c.l.b16 %v1217
    %v1313 = vunpack.c.h.b16 %v1217
    %v1314 = vpack.c.b16 %v1250, %v1250
    %v1315 = vpack.c.b16 %v1251, %v1251
    %v1316 = vpack.c.b16 %v1252, %v1252
    %v1317 = vpack.c.b16 %v1253, %v1253
    %v1318 = vpack.c.b16 %v1254, %v1254
    %v1319 = vpack.c.b16 %v1255, %v1255
    %v1320 = vpack.c.b16 %v1256, %v1256
    %v1321 = vpack.c.b16 %v1257, %v1257
    %v1322 = vpack.c.b16 %v1258, %v1258
    %v1323 = vpack.c.b16 %v1259, %v1259
    %v1324 = vpack.c.b16 %v1260, %v1260
    %v1325 = vpack.c.b16 %v1261, %v1261
    %v1326 = vpack.c.b16 %v1262, %v1262
    %v1327 = vpack.c.b16 %v1263, %v1263
    %v1328 = vpack.c.b16 %v1264, %v1264
    %v1329 = vpack.c.b16 %v1265, %v1265
    %v1330 = vpack.c.b16 %v1266, %v1266
    %v1331 = vpack.c.b16 %v1267, %v1267
    %v1332 = vpack.c.b16 %v1268, %v1268
    %v1333 = vpack.c.b16 %v1269, %v1269
    %v1334 = vpack.c.b16 %v1270, %v1270
    %v1335 = vpack.c.b16 %v1271, %v1271
    %v1336 = vpack.c.b16 %v1272, %v1272
    %v1337 = vpack.c.b16 %v1273, %v1273
    %v1338 = vpack.c.b16 %v1274, %v1274
    %v1339 = vpack.c.b16 %v1275, %v1275
    %v1340 = vpack.c.b16 %v1276, %v1276
    %v1341 = vpack.c.b16 %v1277, %v1277
    %v1342 = vpack.c.b16 %v1278, %v1278
    %v1343 = vpack.c.b16 %v1279, %v1279
    %v1344 = vpack.c.b16 %v1280, %v1280
    %v1345 = vpack.c.b16 %v1281, %v1281
    %v1346 = vpack.c.b16 %v1282, %v1282
    %v1347 = vpack.c.b16 %v1283, %v1283
    %v1348 = vpack.c.b16 %v1284, %v1284
    %v1349 = vpack.c.b16 %v1285, %v1285
    %v1350 = vpack.c.b16 %v1286, %v1286
    %v1351 = vpack.c.b16 %v1287, %v1287
    %v1352 = vpack.c.b16 %v1288, %v1288
    %v1353 = vpack.c.b16 %v1289, %v1289
    %v1354 = vpack.c.b16 %v1290, %v1290
    %v1355 = vpack.c.b16 %v1291, %v1291
    %v1356 = vpack.c.b16 %v1292, %v1292
    %v1357 = vpack.c.b16 %v1293, %v1293
    %v1358 = vpack.c.b16 %v1294, %v1294
    %v1359 = vpack.c.b16 %v1295, %v1295
    %v1360 = vpack.c.b16 %v1296, %v1296
    %v1361 = vpack.c.b16 %v1297, %v1297
    %v1362 = vpack.c.b16 %v1298, %v1298
    %v1363 = vpack.c.b16 %v1299, %v1299
    %v1364 = vpack.c.b16 %v1300, %v1300
    %v1365 = vpack.c.b16 %v1301, %v1301
    %v1366 = vpack.c.b16 %v1302, %v1302
    %v1367 = vpack.c.b16 %v1303, %v1303
    %v1368 = vpack.c.b16 %v1304, %v1304
    %v1369 = vpack.c.b16 %v1305, %v1305
    %v1370 = vpack.c.b16 %v1306, %v1306
    %v1371 = vpack.c.b16 %v1307, %v1307
    %v1372 = vpack.c.b16 %v1308, %v1308
    %v1373 = vpack.c.b16 %v1309, %v1309
    %v1374 = vpack.c.b16 %v1310, %v1310
    %v1375 = vpack.c.b16 %v1311, %v1311
    %v1376 = vpack.c.b16 %v1312, %v1312
    %v1377 = vpack.c.b16 %v1313, %v1313
    %1442 = vst [vmem:[#allocation2] sm:$0xf] %v1314
    %1443 = vst [vmem:[#allocation2 + $0x4] sm:$0xf] %v1315
    %1444 = vst [vmem:[#allocation2 + $0x8] sm:$0xf] %v1316
    %1445 = vst [vmem:[#allocation2 + $0xc] sm:$0xf] %v1317
    %1446 = vst [vmem:[#allocation2 + $0x10] sm:$0xf] %v1318
    %1447 = vst [vmem:[#allocation2 + $0x14] sm:$0xf] %v1319
    %1448 = vst [vmem:[#allocation2 + $0x18] sm:$0xf] %v1320
    %1449 = vst [vmem:[#allocation2 + $0x1c] sm:$0xf] %v1321
    %1450 = vst [vmem:[#allocation2 + $0x20] sm:$0xf] %v1322
    %1451 = vst [vmem:[#allocation2 + $0x24] sm:$0xf] %v1323
    %1452 = vst [vmem:[#allocation2 + $0x28] sm:$0xf] %v1324
    %1453 = vst [vmem:[#allocation2 + $0x2c] sm:$0xf] %v1325
    %1454 = vst [vmem:[#allocation2 + $0x30] sm:$0xf] %v1326
    %1455 = vst [vmem:[#allocation2 + $0x34] sm:$0xf] %v1327
    %1456 = vst [vmem:[#allocation2 + $0x38] sm:$0xf] %v1328
    %1457 = vst [vmem:[#allocation2 + $0x3c] sm:$0xf] %v1329
    %1458 = vst [vmem:[#allocation2 + $0x40] sm:$0xf] %v1330
    %1459 = vst [vmem:[#allocation2 + $0x44] sm:$0xf] %v1331
    %1460 = vst [vmem:[#allocation2 + $0x48] sm:$0xf] %v1332
    %1461 = vst [vmem:[#allocation2 + $0x4c] sm:$0xf] %v1333
    %1462 = vst [vmem:[#allocation2 + $0x50] sm:$0xf] %v1334
    %1463 = vst [vmem:[#allocation2 + $0x54] sm:$0xf] %v1335
    %1464 = vst [vmem:[#allocation2 + $0x58] sm:$0xf] %v1336
    %1465 = vst [vmem:[#allocation2 + $0x5c] sm:$0xf] %v1337
    %1466 = vst [vmem:[#allocation2 + $0x60] sm:$0xf] %v1338
    %1467 = vst [vmem:[#allocation2 + $0x64] sm:$0xf] %v1339
    %1468 = vst [vmem:[#allocation2 + $0x68] sm:$0xf] %v1340
    %1469 = vst [vmem:[#allocation2 + $0x6c] sm:$0xf] %v1341
    %1470 = vst [vmem:[#allocation2 + $0x70] sm:$0xf] %v1342
    %1471 = vst [vmem:[#allocation2 + $0x74] sm:$0xf] %v1343
    %1472 = vst [vmem:[#allocation2 + $0x78] sm:$0xf] %v1344
    %1473 = vst [vmem:[#allocation2 + $0x7c] sm:$0xf] %v1345
    %1474 = vst [vmem:[#allocation2 + $0x80] sm:$0xf] %v1346
    %1475 = vst [vmem:[#allocation2 + $0x84] sm:$0xf] %v1347
    %1476 = vst [vmem:[#allocation2 + $0x88] sm:$0xf] %v1348
    %1477 = vst [vmem:[#allocation2 + $0x8c] sm:$0xf] %v1349
    %1478 = vst [vmem:[#allocation2 + $0x90] sm:$0xf] %v1350
    %1479 = vst [vmem:[#allocation2 + $0x94] sm:$0xf] %v1351
    %1480 = vst [vmem:[#allocation2 + $0x98] sm:$0xf] %v1352
    %1481 = vst [vmem:[#allocation2 + $0x9c] sm:$0xf] %v1353
    %1482 = vst [vmem:[#allocation2 + $0xa0] sm:$0xf] %v1354
    %1483 = vst [vmem:[#allocation2 + $0xa4] sm:$0xf] %v1355
    %1484 = vst [vmem:[#allocation2 + $0xa8] sm:$0xf] %v1356
    %1485 = vst [vmem:[#allocation2 + $0xac] sm:$0xf] %v1357
    %1486 = vst [vmem:[#allocation2 + $0xb0] sm:$0xf] %v1358
    %1487 = vst [vmem:[#allocation2 + $0xb4] sm:$0xf] %v1359
    %1488 = vst [vmem:[#allocation2 + $0xb8] sm:$0xf] %v1360
    %1489 = vst [vmem:[#allocation2 + $0xbc] sm:$0xf] %v1361
    %1490 = vst [vmem:[#allocation2 + $0xc0] sm:$0xf] %v1362
    %1491 = vst [vmem:[#allocation2 + $0xc4] sm:$0xf] %v1363
    %1492 = vst [vmem:[#allocation2 + $0xc8] sm:$0xf] %v1364
    %1493 = vst [vmem:[#allocation2 + $0xcc] sm:$0xf] %v1365
    %1494 = vst [vmem:[#allocation2 + $0xd0] sm:$0xf] %v1366
    %1495 = vst [vmem:[#allocation2 + $0xd4] sm:$0xf] %v1367
    %1496 = vst [vmem:[#allocation2 + $0xd8] sm:$0xf] %v1368
    %1497 = vst [vmem:[#allocation2 + $0xdc] sm:$0xf] %v1369
    %1498 = vst [vmem:[#allocation2 + $0xe0] sm:$0xf] %v1370
    %1499 = vst [vmem:[#allocation2 + $0xe4] sm:$0xf] %v1371
    %1500 = vst [vmem:[#allocation2 + $0xe8] sm:$0xf] %v1372
    %1501 = vst [vmem:[#allocation2 + $0xec] sm:$0xf] %v1373
    %1502 = vst [vmem:[#allocation2 + $0xf0] sm:$0xf] %v1374
    %1503 = vst [vmem:[#allocation2 + $0xf4] sm:$0xf] %v1375
    %1504 = vst [vmem:[#allocation2 + $0xf8] sm:$0xf] %v1376
    %1505 = vst [vmem:[#allocation2 + $0xfc] sm:$0xf] %v1377
    // Predicated region
    $region14: #{tpu_custom_call.1} parent=1 // pred_check
      _
    $region15: #{tpu_custom_call.1} parent=1 // pred_check_branch
      %1507 = sbr.rel (0) target = $region17
    $region16: #{tpu_custom_call.1} parent=1 // pred_region
      %s1509 = ssub.s32 4096, 4096
      %1510 = vsyncadd [#allocation3], %s1509
      %s1511 = sshll.u32 [#allocation2], 4
      %s1512 = int_to_ptr.vmem [resolvable:$true] %s1511
      %1517 = dma.vmem_to_hbm [thread:$0]  %s1512, 4096, %s3, [#allocation3], 64, 64, 4
    $region17: #{tpu_custom_call.1} parent=1 // pred_fallthru
      _
    // Predicated region
    $region18: #{tpu_custom_call.1} parent=1 // pred_check
      _
    $region19: #{tpu_custom_call.1} parent=1 // pred_check_branch
      %1519 = sbr.rel (0) target = $region21
    $region20: #{tpu_custom_call.1} parent=1 // pred_region
      %1520 = dma.done [#allocation3], 4096
    $region21: #{tpu_custom_call.1} parent=1 // pred_fallthru
      _
    %1521 = vsyncpa [#allocation3], 1

</llo_original>
